<compile_context>
chip_gen: v6e
topology: v6e:2x2x1
jax: 0.10.0
libtpu: 0.0.40
codegen_flags: <defaults>
</compile_context>

<pallas_src>
from functools import partial

import numpy as np
import jax
import jax.numpy as jnp
from jax.experimental import pallas as pl
from jax.experimental.pallas import tpu as pltpu


def _round_up(x: int, m: int) -> int:
    return ((x + m - 1) // m) * m


def fm_kernel(idx_ref, rhs_t_ref, bias_ref, out_ref, *, factor_dim: int):
    """One batch tile.

    idx_ref   : (F, TILE_B) int32   global (offset) feature index per field
    rhs_t_ref : (R_pad, Fd) f32/bf16 fused, pre-scaled weights
                                     [sqrt(.5)*E | -0.5*E*E | w]^T, zero padded
    bias_ref  : (1, 1)      f32     linear bias (SMEM)
    out_ref   : (1, TILE_B) f32     lane-dense per-sample output
    """
    num_fields, tile_b = idx_ref.shape
    r_pad, feature_dim = rhs_t_ref.shape

    ids = idx_ref[...]                                               # (F, TILE_B)
    # (Fd, 1) iota; broadcasting happens inside each compare so we never
    # materialize / keep live a (Fd, TILE_B) int32 block.
    rows = jax.lax.broadcasted_iota(jnp.int32, (feature_dim, 1), 0)

    # Transposed multi-hot built in-registers as a bool OR (fields disjoint),
    # single cast to the matmul dtype at the end.
    mask = rows == ids[0:1, :]                                       # (Fd, TILE_B) bool
    for f in range(1, num_fields):                                   # F tiny & static
        mask = mask | (rows == ids[f:f + 1, :])
    oh_t = mask.astype(rhs_t_ref.dtype)

    # Single fused MXU matmul.  Rows of s: [sqrt(.5)*sum_emb | -.5*sum_sq | lin | 0]
    s = jnp.dot(rhs_t_ref[...], oh_t,
                preferred_element_type=jnp.float32)                  # (R_pad, TILE_B)

    # Epilogue: square the first D rows (giving 0.5*sum_emb^2), pass the rest
    # through, reduce over rows (XLU has slack), add bias.
    row_id = jax.lax.broadcasted_iota(jnp.int32, (r_pad, 1), 0)
    vals = jnp.where(row_id < factor_dim, s * s, s)                  # (R_pad, TILE_B)
    out_ref[...] = jnp.sum(vals, axis=0, keepdims=True) + bias_ref[0, 0]


def factorization_machine(x_idx, emb_weight, lin_weight_t, lin_bias, field_dims,
                          *, tile_b=None, compute_dtype=jnp.float32):
    """x_idx: (B, num_fields) int; returns (B,) float32."""
    field_dims = list(field_dims)
    feature_dim = int(sum(field_dims))
    num_fields = len(field_dims)
    batch = int(x_idx.shape[0])
    factor_dim = int(emb_weight.shape[1])

    # --- glue: per-field offsets (same as torch FeaturesEmbedding/Linear) ---
    offsets = jnp.asarray(
        np.concatenate([[0], np.cumsum(field_dims)[:-1]]), dtype=jnp.int32)
    idx = x_idx.astype(jnp.int32) + offsets[None, :]                  # (B, F)

    # --- batch tiling: lane-major, TILE_B a tunable multiple of 128 ---
    if tile_b is None:
        tile_b = min(1024, _round_up(max(batch, 1), 128))
    tile_b = _round_up(int(tile_b), 128)
    b_pad = _round_up(batch, tile_b)
    num_tiles = b_pad // tile_b
    idx_t = jnp.zeros((num_fields, b_pad), jnp.int32).at[:, :batch].set(idx.T)

    # --- fused, pre-transposed, pre-scaled weight block (built ONCE here) ---
    #   rows [0, D)    : sqrt(0.5) * E^T     -> squared in the epilogue
    #   rows [D, 2D)   : -0.5 * (E*E)^T      -> passed through
    #   row  2D        : w^T                 -> passed through
    r_used = 2 * factor_dim + 1
    r_pad = _round_up(r_used, 8)
    sqrt_half = np.float32(np.sqrt(0.5))
    rhs = jnp.concatenate(
        [emb_weight * sqrt_half, -0.5 * emb_weight * emb_weight, lin_weight_t],
        axis=1)                                                       # (Fd, 2D+1)
    rhs_t = (jnp.zeros((r_pad, feature_dim), compute_dtype)
             .at[:r_used, :].set(rhs.T.astype(compute_dtype)))

    bias2d = jnp.asarray(lin_bias, jnp.float32).reshape(1, 1)

    itemsize = jnp.dtype(compute_dtype).itemsize
    cost = pl.CostEstimate(
        flops=(2 * b_pad * feature_dim * r_pad           # fused MXU matmul
               + num_fields * feature_dim * b_pad        # one-hot compares/ORs
               + 2 * b_pad * r_pad),                     # epilogue
        transcendentals=0,
        bytes_accessed=(4 * num_fields * b_pad + itemsize * r_pad * feature_dim
                        + 4 * b_pad + 4),
    )

    out = pl.pallas_call(
        partial(fm_kernel, factor_dim=factor_dim),
        out_shape=jax.ShapeDtypeStruct((1, b_pad), jnp.float32),
        grid=(num_tiles,),
        in_specs=[
            pl.BlockSpec((num_fields, tile_b), lambda i: (0, i)),     # indices
            pl.BlockSpec((r_pad, feature_dim), lambda i: (0, 0)),     # resident weights
            pl.BlockSpec((1, 1), lambda i: (0, 0),
                         memory_space=pltpu.MemorySpace.SMEM),        # bias
        ],
        out_specs=pl.BlockSpec((1, tile_b), lambda i: (0, i)),        # lane-dense out
        compiler_params=pltpu.CompilerParams(
            dimension_semantics=("parallel",),
            vmem_limit_bytes=32 * 1024 * 1024,
        ),
        cost_estimate=cost,
    )(idx_t, rhs_t, bias2d)

    return out[0, :batch]


def reference_fm(x_idx, emb_weight, lin_weight_t, lin_bias, field_dims):
    """Pure-JAX reference mirroring the PyTorch module."""
    offsets = jnp.asarray(
        np.concatenate([[0], np.cumsum(field_dims)[:-1]]), dtype=jnp.int32)
    idx = x_idx.astype(jnp.int32) + offsets[None, :]
    emb = emb_weight[idx]                                   # (B, F, D)
    square_of_sum = jnp.sum(emb, axis=1) ** 2
    sum_of_square = jnp.sum(emb ** 2, axis=1)
    fm = 0.5 * jnp.sum(square_of_sum - sum_of_square, axis=1)
    lin = jnp.sum(lin_weight_t[idx, 0], axis=1) + lin_bias[0]
    return lin + fm


if __name__ == "__main__":
    # small, deterministic configuration
    field_dims = [10, 20, 30, 40, 28]        # feature_dim = 128
    feature_dim = int(sum(field_dims))
    factor_dim = 16
    batch = 8
    num_fields = len(field_dims)

    key = jax.random.PRNGKey(0)
    k_emb, k_lin, k_x, k_x2 = jax.random.split(key, 4)

    # FeaturesEmbedding: xavier_uniform_ on (feature_dim, factor_dim)
    bound = float(np.sqrt(6.0 / (feature_dim + factor_dim)))
    emb_weight = jax.random.uniform(
        k_emb, (feature_dim, factor_dim), jnp.float32, -bound, bound)

    # FeaturesLinear: normal(0, 0.01) weight stored transposed, bias = 0
    lin_weight_t = 0.01 * jax.random.normal(k_lin, (feature_dim, 1), jnp.float32)
    lin_bias = jnp.zeros((1,), jnp.float32)

    # integer inputs: one valid label-encoded index per field
    maxvals = jnp.asarray(field_dims, dtype=jnp.int32)
    x_idx = (jax.random.randint(k_x, (batch, num_fields), 0, 10_000) % maxvals
             ).astype(jnp.int32)

    # --- single-tile path, f32 compute, tight tolerance ---
    y = jax.block_until_ready(
        factorization_machine(x_idx, emb_weight, lin_weight_t, lin_bias,
                              field_dims))
    y_ref = reference_fm(x_idx, emb_weight, lin_weight_t, lin_bias, field_dims)
    np.testing.assert_allclose(np.asarray(y), np.asarray(y_ref),
                               rtol=1e-4, atol=1e-4)

    # --- multi-tile grid + batch padding (tile_b=256 -> 3 tiles over 768) ---
    batch2 = 600
    x_idx2 = (jax.random.randint(k_x2, (batch2, num_fields), 0, 10_000) % maxvals
              ).astype(jnp.int32)
    y2 = jax.block_until_ready(
        factorization_machine(x_idx2, emb_weight, lin_weight_t, lin_bias,
                              field_dims, tile_b=256))
    y2_ref = reference_fm(x_idx2, emb_weight, lin_weight_t, lin_bias, field_dims)
    np.testing.assert_allclose(np.asarray(y2), np.asarray(y2_ref),
                               rtol=1e-4, atol=1e-4)

    # --- optional bf16 operand path (accuracy-gated), loose tolerance ---
    y2_bf16 = jax.block_until_ready(
        factorization_machine(x_idx2, emb_weight, lin_weight_t, lin_bias,
                              field_dims, tile_b=256,
                              compute_dtype=jnp.bfloat16))
    np.testing.assert_allclose(np.asarray(y2_bf16), np.asarray(y2_ref),
                               rtol=5e-2, atol=5e-2)

    print("KERNEL_OK")
</pallas_src>

<mosaic_0001>
module attributes {stable_mosaic.version = 11 : i64} {
  func.func @fm_kernel(%arg0: i32, %arg1: memref<5x128xi32, #tpu.memory_space<vmem>>, %arg2: memref<40x128xf32, #tpu.memory_space<vmem>>, %arg3: memref<1x1xf32, #tpu.memory_space<smem>>, %arg4: memref<1x128xf32, #tpu.memory_space<vmem>>) attributes {dimension_semantics = [#tpu.dimension_semantics<parallel>], iteration_bounds = array<i64: 1>, scalar_prefetch = 0 : i64, scratch_operands = 0 : i64, tpu.core_type = #tpu.core_type<tc>, window_params = [{transform_indices = @transform_0, window_bounds = array<i64: 5, 128>}, {pipeline_mode = #tpu.pipeline_mode<synchronous>, transform_indices = @transform_1, window_bounds = array<i64: 40, 128>}, {transform_indices = @transform_2, window_bounds = array<i64: 1, 1>}, {transform_indices = @transform_3, window_bounds = array<i64: 1, 128>}]} {
    %c0 = arith.constant 0 : index
    %c0_0 = arith.constant 0 : index
    %0 = vector.load %arg1[%c0, %c0_0] : memref<5x128xi32, #tpu.memory_space<vmem>>, vector<5x128xi32>
    %1 = tpu.iota {dimensions = array<i32: 0>} : vector<128x1xi32>
    %2 = vector.extract_strided_slice %0 {offsets = [0, 0], sizes = [1, 128], strides = [1, 1]} : vector<5x128xi32> to vector<1x128xi32>
    %3 = vector.broadcast %1 : vector<128x1xi32> to vector<128x128xi32>
    %4 = vector.broadcast %2 : vector<1x128xi32> to vector<128x128xi32>
    %5 = arith.cmpi eq, %3, %4 : vector<128x128xi32>
    %6 = vector.extract_strided_slice %0 {offsets = [1, 0], sizes = [1, 128], strides = [1, 1]} : vector<5x128xi32> to vector<1x128xi32>
    %7 = vector.broadcast %1 : vector<128x1xi32> to vector<128x128xi32>
    %8 = vector.broadcast %6 : vector<1x128xi32> to vector<128x128xi32>
    %9 = arith.cmpi eq, %7, %8 : vector<128x128xi32>
    %10 = arith.ori %5, %9 : vector<128x128xi1>
    %11 = vector.extract_strided_slice %0 {offsets = [2, 0], sizes = [1, 128], strides = [1, 1]} : vector<5x128xi32> to vector<1x128xi32>
    %12 = vector.broadcast %1 : vector<128x1xi32> to vector<128x128xi32>
    %13 = vector.broadcast %11 : vector<1x128xi32> to vector<128x128xi32>
    %14 = arith.cmpi eq, %12, %13 : vector<128x128xi32>
    %15 = arith.ori %10, %14 : vector<128x128xi1>
    %16 = vector.extract_strided_slice %0 {offsets = [3, 0], sizes = [1, 128], strides = [1, 1]} : vector<5x128xi32> to vector<1x128xi32>
    %17 = vector.broadcast %1 : vector<128x1xi32> to vector<128x128xi32>
    %18 = vector.broadcast %16 : vector<1x128xi32> to vector<128x128xi32>
    %19 = arith.cmpi eq, %17, %18 : vector<128x128xi32>
    %20 = arith.ori %15, %19 : vector<128x128xi1>
    %21 = vector.extract_strided_slice %0 {offsets = [4, 0], sizes = [1, 128], strides = [1, 1]} : vector<5x128xi32> to vector<1x128xi32>
    %22 = vector.broadcast %1 : vector<128x1xi32> to vector<128x128xi32>
    %23 = vector.broadcast %21 : vector<1x128xi32> to vector<128x128xi32>
    %24 = arith.cmpi eq, %22, %23 : vector<128x128xi32>
    %25 = arith.ori %20, %24 : vector<128x128xi1>
    %26 = arith.extui %25 : vector<128x128xi1> to vector<128x128xi32>
    %27 = arith.sitofp %26 : vector<128x128xi32> to vector<128x128xf32>
    %c0_1 = arith.constant 0 : index
    %c0_2 = arith.constant 0 : index
    %28 = vector.load %arg2[%c0_1, %c0_2] : memref<40x128xf32, #tpu.memory_space<vmem>>, vector<40x128xf32>
    %cst = arith.constant dense<0.000000e+00> : vector<40x128xf32>
    %29 = tpu.matmul %28, %27, %cst {dimension_numbers = #tpu.dot_dimension_numbers<[1], [0], [0], [1], [0, 0, 1, 1], [], []>} : vector<40x128xf32>, vector<128x128xf32>, vector<40x128xf32> -> vector<40x128xf32>
    %30 = tpu.iota {dimensions = array<i32: 0>} : vector<40x1xi32>
    %c16_i32 = arith.constant 16 : i32
    %31 = vector.broadcast %c16_i32 : i32 to vector<40x1xi32>
    %32 = arith.cmpi slt, %30, %31 : vector<40x1xi32>
    %33 = arith.mulf %29, %29 : vector<40x128xf32>
    %34 = vector.shape_cast %32 : vector<40x1xi1> to vector<40x1xi1>
    %35 = vector.broadcast %34 : vector<40x1xi1> to vector<40x128xi1>
    %36 = arith.select %35, %33, %29 : vector<40x128xi1>, vector<40x128xf32>
    %cst_3 = arith.constant dense<0.000000e+00> : vector<128xf32>
    %37 = vector.multi_reduction <add>, %36, %cst_3 [0] : vector<40x128xf32> to vector<128xf32>
    %38 = vector.shape_cast %37 : vector<128xf32> to vector<1x128xf32>
    %c0_4 = arith.constant 0 : index
    %c0_5 = arith.constant 0 : index
    %39 = memref.load %arg3[%c0_4, %c0_5] : memref<1x1xf32, #tpu.memory_space<smem>>
    %40 = vector.broadcast %39 : f32 to vector<1x128xf32>
    %41 = arith.addf %38, %40 : vector<1x128xf32>
    %c0_6 = arith.constant 0 : index
    %c0_7 = arith.constant 0 : index
    %42 = vector.load %arg4[%c0_6, %c0_7] : memref<1x128xf32, #tpu.memory_space<vmem>>, vector<1x128xf32>
    tpu.vector_store %arg4[%c0_6, %c0_7], %41 {strides = array<i32>} : memref<1x128xf32, #tpu.memory_space<vmem>>, vector<1x128xf32>,
    return
  }
  func.func @transform_0(%arg0: i32) -> (i32, i32) {
    %c0_i32 = arith.constant 0 : i32
    %c0_i32_0 = arith.constant 0 : i32
    return %c0_i32, %arg0 : i32, i32
  }
  func.func @transform_1(%arg0: i32) -> (i32, i32) {
    %c0_i32 = arith.constant 0 : i32
    %c0_i32_0 = arith.constant 0 : i32
    %c0_i32_1 = arith.constant 0 : i32
    return %c0_i32, %c0_i32_0 : i32, i32
  }
  func.func @transform_2(%arg0: i32) -> (i32, i32) {
    %c0_i32 = arith.constant 0 : i32
    %c0_i32_0 = arith.constant 0 : i32
    %c0_i32_1 = arith.constant 0 : i32
    return %c0_i32, %c0_i32_0 : i32, i32
  }
  func.func @transform_3(%arg0: i32) -> (i32, i32) {
    %c0_i32 = arith.constant 0 : i32
    %c0_i32_0 = arith.constant 0 : i32
    return %c0_i32, %arg0 : i32, i32
  }
}

</mosaic_0001>

<llo_original>
// kernel: tpu_custom_call.1
$region0: #{tpu_custom_call.1}
  #allocation0 [shape = 'u32[]', space=smem, size = 0x4, offset = 0x4, fixed_abs, tag = 'smem constant byte address 0x4 - core index']
  #allocation1 [shape = 'u32[144,128]{1,0:T(1,128)}', space=vmem, size = 0x12000, scoped, tag = 'internal scratch']
  #allocation2 [shape = 'f32[1,1]{1,0:T(1,128)S(6)}', space=smem, size = 0x200, scoped, tag = 'scoped memory for tpu_custom_call.1']
  %s0 = inlined_call_operand.hbm [shape: s32[5,128], index: 0, kind: input, shape index: {}]
  %s1 = inlined_call_operand.hbm [shape: f32[40,128], index: 1, kind: input, shape index: {}]
  %s2 = inlined_call_operand.<no memory space> [shape: f32[1,1], index: 2, kind: input, shape index: {}]
  %s3 = inlined_call_operand.hbm [shape: f32[1,128], index: 3, kind: output, shape index: {}]
  %s4 = sld [smem:[#allocation0]]
  $region30: #{tpu_custom_call.1} parent=0
    _
  %s6 = ssub.s32 1, %s4
  %s7 = scalar_select 0, %s6, %s4
  %8 = sst [smem:[#allocation2]] %s2
  $region1: #{tpu_custom_call.1} parent=0
    #allocation3 [shape = 'u8[4096]{0}', space=vmem, size = 0x1000, scoped, tag = 'input window, operand 0, single buffered']
    #allocation4 [shape = 's32[1]{0}', space=sflag, size = 0x4, scoped, tag = 'scoped memory for tpu_custom_call.1']
    #allocation5 [shape = 's32[1]{0}', space=sflag, size = 0x4, scoped, tag = 'scoped memory for tpu_custom_call.1']
    #allocation6 [shape = 'u8[20480]{0}', space=vmem, size = 0x5000, scoped, tag = 'input window, operand 1, single buffered']
    #allocation7 [shape = 's32[1]{0}', space=sflag, size = 0x4, scoped, tag = 'scoped memory for tpu_custom_call.1']
    #allocation8 [shape = 'u8[512]{0}', space=vmem, size = 0x400, scoped, tag = 'output window, operand 0, single buffered']
    %9 = vsyncpa [#allocation4], 0
    %10 = vsyncpa [#allocation7], 0
    %11 = vsyncpa [#allocation5], 0
    // Predicated region
    $region2: #{tpu_custom_call.1} parent=1 // pred_check
      _
    $region3: #{tpu_custom_call.1} parent=1 // pred_check_branch
      %13 = sbr.rel (0) target = $region5
    $region4: #{tpu_custom_call.1} parent=1 // pred_region
      %s15 = ssub.s32 128, 128
      %16 = vsyncadd [#allocation4], %s15
      %s18 = sshll.u32 [#allocation3], 4
      %s19 = int_to_ptr.vmem [resolvable:$true] %s18
      %21 = dma.hbm_to_vmem [thread:$0]  %s0, 128, %s19, [#allocation4]
    $region5: #{tpu_custom_call.1} parent=1 // pred_fallthru
      _
    // Predicated region
    $region6: #{tpu_custom_call.1} parent=1 // pred_check
      _
    $region7: #{tpu_custom_call.1} parent=1 // pred_check_branch
      %23 = sbr.rel (0) target = $region9
    $region8: #{tpu_custom_call.1} parent=1 // pred_region
      %s25 = ssub.s32 640, 640
      %26 = vsyncadd [#allocation7], %s25
      %s27 = sshll.u32 [#allocation6], 4
      %s28 = int_to_ptr.vmem [resolvable:$true] %s27
      %33 = dma.hbm_to_vmem [thread:$0]  %s1, 640, %s28, [#allocation7], 128, 128, 8
    $region9: #{tpu_custom_call.1} parent=1 // pred_fallthru
      _
    // Predicated region
    $region10: #{tpu_custom_call.1} parent=1 // pred_check
      _
    $region11: #{tpu_custom_call.1} parent=1 // pred_check_branch
      %35 = sbr.rel (0) target = $region13
    $region12: #{tpu_custom_call.1} parent=1 // pred_region
      _
    $region13: #{tpu_custom_call.1} parent=1 // pred_fallthru
      _
    // Predicated region
    $region14: #{tpu_custom_call.1} parent=1 // pred_check
      _
    $region15: #{tpu_custom_call.1} parent=1 // pred_check_branch
      %37 = sbr.rel (0) target = $region17
    $region16: #{tpu_custom_call.1} parent=1 // pred_region
      %38 = dma.done [#allocation4], 128
    $region17: #{tpu_custom_call.1} parent=1 // pred_fallthru
      _
    // Predicated region
    $region18: #{tpu_custom_call.1} parent=1 // pred_check
      _
    $region19: #{tpu_custom_call.1} parent=1 // pred_check_branch
      %40 = sbr.rel (0) target = $region21
    $region20: #{tpu_custom_call.1} parent=1 // pred_region
      %41 = dma.done [#allocation7], 640
    $region21: #{tpu_custom_call.1} parent=1 // pred_fallthru
      _
    %v42 = vld [vmem:[#allocation3] sm:$0x1f]
    %v43 = vlaneseq
    %v44 = vshrl.u32 %v43, 7
    %v45 = vadd.s32 %v44, 8
    %v46 = vadd.s32 %v44, 16
    %v47 = vadd.s32 %v44, 24
    %v48 = vadd.s32 %v44, 32
    %v49 = vadd.s32 %v44, 40
    %v50 = vadd.s32 %v44, 48
    %v51 = vadd.s32 %v44, 56
    %v52 = vadd.s32 %v44, 64
    %v53 = vadd.s32 %v44, 72
    %v54 = vadd.s32 %v44, 80
    %v55 = vadd.s32 %v44, 88
    %v56 = vadd.s32 %v44, 96
    %v57 = vadd.s32 %v44, 104
    %v58 = vadd.s32 %v44, 112
    %v59 = vadd.s32 %v44, 120
    %v60 = vlaneseq
    %v61 = vshrl.u32 %v60, 7
    %v62 = vsub.s32 0, %v61
    %v63 = vrot.slane %v42, %v62
    %vm64 = vcmp.eq.s32.totalorder %v44, %v63
    %vm65 = vcmp.eq.s32.totalorder %v45, %v63
    %vm66 = vcmp.eq.s32.totalorder %v46, %v63
    %vm67 = vcmp.eq.s32.totalorder %v47, %v63
    %vm68 = vcmp.eq.s32.totalorder %v48, %v63
    %vm69 = vcmp.eq.s32.totalorder %v49, %v63
    %vm70 = vcmp.eq.s32.totalorder %v50, %v63
    %vm71 = vcmp.eq.s32.totalorder %v51, %v63
    %vm72 = vcmp.eq.s32.totalorder %v52, %v63
    %vm73 = vcmp.eq.s32.totalorder %v53, %v63
    %vm74 = vcmp.eq.s32.totalorder %v54, %v63
    %vm75 = vcmp.eq.s32.totalorder %v55, %v63
    %vm76 = vcmp.eq.s32.totalorder %v56, %v63
    %vm77 = vcmp.eq.s32.totalorder %v57, %v63
    %vm78 = vcmp.eq.s32.totalorder %v58, %v63
    %vm79 = vcmp.eq.s32.totalorder %v59, %v63
    %v80 = vlaneseq
    %v81 = vshrl.u32 %v80, 7
    %v82 = vsub.s32 1, %v81
    %v83 = vrot.slane %v42, %v82
    %vm84 = vcmp.eq.s32.totalorder %v44, %v83
    %vm85 = vcmp.eq.s32.totalorder %v45, %v83
    %vm86 = vcmp.eq.s32.totalorder %v46, %v83
    %vm87 = vcmp.eq.s32.totalorder %v47, %v83
    %vm88 = vcmp.eq.s32.totalorder %v48, %v83
    %vm89 = vcmp.eq.s32.totalorder %v49, %v83
    %vm90 = vcmp.eq.s32.totalorder %v50, %v83
    %vm91 = vcmp.eq.s32.totalorder %v51, %v83
    %vm92 = vcmp.eq.s32.totalorder %v52, %v83
    %vm93 = vcmp.eq.s32.totalorder %v53, %v83
    %vm94 = vcmp.eq.s32.totalorder %v54, %v83
    %vm95 = vcmp.eq.s32.totalorder %v55, %v83
    %vm96 = vcmp.eq.s32.totalorder %v56, %v83
    %vm97 = vcmp.eq.s32.totalorder %v57, %v83
    %vm98 = vcmp.eq.s32.totalorder %v58, %v83
    %vm99 = vcmp.eq.s32.totalorder %v59, %v83
    %vm100 = vmor %vm64, %vm84
    %vm101 = vmor %vm65, %vm85
    %vm102 = vmor %vm66, %vm86
    %vm103 = vmor %vm67, %vm87
    %vm104 = vmor %vm68, %vm88
    %vm105 = vmor %vm69, %vm89
    %vm106 = vmor %vm70, %vm90
    %vm107 = vmor %vm71, %vm91
    %vm108 = vmor %vm72, %vm92
    %vm109 = vmor %vm73, %vm93
    %vm110 = vmor %vm74, %vm94
    %vm111 = vmor %vm75, %vm95
    %vm112 = vmor %vm76, %vm96
    %vm113 = vmor %vm77, %vm97
    %vm114 = vmor %vm78, %vm98
    %vm115 = vmor %vm79, %vm99
    %v116 = vlaneseq
    %v117 = vshrl.u32 %v116, 7
    %v118 = vsub.s32 2, %v117
    %v119 = vrot.slane %v42, %v118
    %vm120 = vcmp.eq.s32.totalorder %v44, %v119
    %vm121 = vcmp.eq.s32.totalorder %v45, %v119
    %vm122 = vcmp.eq.s32.totalorder %v46, %v119
    %vm123 = vcmp.eq.s32.totalorder %v47, %v119
    %vm124 = vcmp.eq.s32.totalorder %v48, %v119
    %vm125 = vcmp.eq.s32.totalorder %v49, %v119
    %vm126 = vcmp.eq.s32.totalorder %v50, %v119
    %vm127 = vcmp.eq.s32.totalorder %v51, %v119
    %vm128 = vcmp.eq.s32.totalorder %v52, %v119
    %vm129 = vcmp.eq.s32.totalorder %v53, %v119
    %vm130 = vcmp.eq.s32.totalorder %v54, %v119
    %vm131 = vcmp.eq.s32.totalorder %v55, %v119
    %vm132 = vcmp.eq.s32.totalorder %v56, %v119
    %vm133 = vcmp.eq.s32.totalorder %v57, %v119
    %vm134 = vcmp.eq.s32.totalorder %v58, %v119
    %vm135 = vcmp.eq.s32.totalorder %v59, %v119
    %vm136 = vmor %vm100, %vm120
    %vm137 = vmor %vm101, %vm121
    %vm138 = vmor %vm102, %vm122
    %vm139 = vmor %vm103, %vm123
    %vm140 = vmor %vm104, %vm124
    %vm141 = vmor %vm105, %vm125
    %vm142 = vmor %vm106, %vm126
    %vm143 = vmor %vm107, %vm127
    %vm144 = vmor %vm108, %vm128
    %vm145 = vmor %vm109, %vm129
    %vm146 = vmor %vm110, %vm130
    %vm147 = vmor %vm111, %vm131
    %vm148 = vmor %vm112, %vm132
    %vm149 = vmor %vm113, %vm133
    %vm150 = vmor %vm114, %vm134
    %vm151 = vmor %vm115, %vm135
    %v152 = vlaneseq
    %v153 = vshrl.u32 %v152, 7
    %v154 = vsub.s32 3, %v153
    %v155 = vrot.slane %v42, %v154
    %vm156 = vcmp.eq.s32.totalorder %v44, %v155
    %vm157 = vcmp.eq.s32.totalorder %v45, %v155
    %vm158 = vcmp.eq.s32.totalorder %v46, %v155
    %vm159 = vcmp.eq.s32.totalorder %v47, %v155
    %vm160 = vcmp.eq.s32.totalorder %v48, %v155
    %vm161 = vcmp.eq.s32.totalorder %v49, %v155
    %vm162 = vcmp.eq.s32.totalorder %v50, %v155
    %vm163 = vcmp.eq.s32.totalorder %v51, %v155
    %vm164 = vcmp.eq.s32.totalorder %v52, %v155
    %vm165 = vcmp.eq.s32.totalorder %v53, %v155
    %vm166 = vcmp.eq.s32.totalorder %v54, %v155
    %vm167 = vcmp.eq.s32.totalorder %v55, %v155
    %vm168 = vcmp.eq.s32.totalorder %v56, %v155
    %vm169 = vcmp.eq.s32.totalorder %v57, %v155
    %vm170 = vcmp.eq.s32.totalorder %v58, %v155
    %vm171 = vcmp.eq.s32.totalorder %v59, %v155
    %vm172 = vmor %vm136, %vm156
    %vm173 = vmor %vm137, %vm157
    %vm174 = vmor %vm138, %vm158
    %vm175 = vmor %vm139, %vm159
    %vm176 = vmor %vm140, %vm160
    %vm177 = vmor %vm141, %vm161
    %vm178 = vmor %vm142, %vm162
    %vm179 = vmor %vm143, %vm163
    %vm180 = vmor %vm144, %vm164
    %vm181 = vmor %vm145, %vm165
    %vm182 = vmor %vm146, %vm166
    %vm183 = vmor %vm147, %vm167
    %vm184 = vmor %vm148, %vm168
    %vm185 = vmor %vm149, %vm169
    %vm186 = vmor %vm150, %vm170
    %vm187 = vmor %vm151, %vm171
    %v188 = vlaneseq
    %v189 = vshrl.u32 %v188, 7
    %v190 = vsub.s32 4, %v189
    %v191 = vrot.slane %v42, %v190
    %vm192 = vcmp.eq.s32.totalorder %v44, %v191
    %vm193 = vcmp.eq.s32.totalorder %v45, %v191
    %vm194 = vcmp.eq.s32.totalorder %v46, %v191
    %vm195 = vcmp.eq.s32.totalorder %v47, %v191
    %vm196 = vcmp.eq.s32.totalorder %v48, %v191
    %vm197 = vcmp.eq.s32.totalorder %v49, %v191
    %vm198 = vcmp.eq.s32.totalorder %v50, %v191
    %vm199 = vcmp.eq.s32.totalorder %v51, %v191
    %vm200 = vcmp.eq.s32.totalorder %v52, %v191
    %vm201 = vcmp.eq.s32.totalorder %v53, %v191
    %vm202 = vcmp.eq.s32.totalorder %v54, %v191
    %vm203 = vcmp.eq.s32.totalorder %v55, %v191
    %vm204 = vcmp.eq.s32.totalorder %v56, %v191
    %vm205 = vcmp.eq.s32.totalorder %v57, %v191
    %vm206 = vcmp.eq.s32.totalorder %v58, %v191
    %vm207 = vcmp.eq.s32.totalorder %v59, %v191
    %vm208 = vmor %vm172, %vm192
    %vm209 = vmor %vm173, %vm193
    %vm210 = vmor %vm174, %vm194
    %vm211 = vmor %vm175, %vm195
    %vm212 = vmor %vm176, %vm196
    %vm213 = vmor %vm177, %vm197
    %vm214 = vmor %vm178, %vm198
    %vm215 = vmor %vm179, %vm199
    %vm216 = vmor %vm180, %vm200
    %vm217 = vmor %vm181, %vm201
    %vm218 = vmor %vm182, %vm202
    %vm219 = vmor %vm183, %vm203
    %vm220 = vmor %vm184, %vm204
    %vm221 = vmor %vm185, %vm205
    %vm222 = vmor %vm186, %vm206
    %vm223 = vmor %vm187, %vm207
    %v224 = vsel %vm208, 1, 0
    %v225 = vsel %vm209, 1, 0
    %v226 = vsel %vm210, 1, 0
    %v227 = vsel %vm211, 1, 0
    %v228 = vsel %vm212, 1, 0
    %v229 = vsel %vm213, 1, 0
    %v230 = vsel %vm214, 1, 0
    %v231 = vsel %vm215, 1, 0
    %v232 = vsel %vm216, 1, 0
    %v233 = vsel %vm217, 1, 0
    %v234 = vsel %vm218, 1, 0
    %v235 = vsel %vm219, 1, 0
    %v236 = vsel %vm220, 1, 0
    %v237 = vsel %vm221, 1, 0
    %v238 = vsel %vm222, 1, 0
    %v239 = vsel %vm223, 1, 0
    %v240 = vcvt.s32.f32 %v224
    %v241 = vcvt.s32.f32 %v225
    %v242 = vcvt.s32.f32 %v226
    %v243 = vcvt.s32.f32 %v227
    %v244 = vcvt.s32.f32 %v228
    %v245 = vcvt.s32.f32 %v229
    %v246 = vcvt.s32.f32 %v230
    %v247 = vcvt.s32.f32 %v231
    %v248 = vcvt.s32.f32 %v232
    %v249 = vcvt.s32.f32 %v233
    %v250 = vcvt.s32.f32 %v234
    %v251 = vcvt.s32.f32 %v235
    %v252 = vcvt.s32.f32 %v236
    %v253 = vcvt.s32.f32 %v237
    %v254 = vcvt.s32.f32 %v238
    %v255 = vcvt.s32.f32 %v239
    %v256 = vld [vmem:[#allocation6] sm:$0xff]
    %v257 = vld [vmem:[#allocation6 + $0x8] sm:$0xff]
    %v258 = vld [vmem:[#allocation6 + $0x10] sm:$0xff]
    %v259 = vld [vmem:[#allocation6 + $0x18] sm:$0xff]
    %v260 = vld [vmem:[#allocation6 + $0x20] sm:$0xff]
    %261 = vmatprep.subr.mxu0 0.0
    %262 = vmatpush1.msra.mxu0 %v255
    %263 = vmatprep.subr.mxu0 0.0
    %264 = vmatpush1.msra.mxu0 %v254
    %265 = vmatprep.subr.mxu0 0.0
    %266 = vmatpush1.msra.mxu0 %v253
    %267 = vmatprep.subr.mxu0 0.0
    %268 = vmatpush1.msra.mxu0 %v252
    %269 = vmatprep.subr.mxu0 0.0
    %270 = vmatpush1.msra.mxu0 %v251
    %271 = vmatprep.subr.mxu0 0.0
    %272 = vmatpush1.msra.mxu0 %v250
    %273 = vmatprep.subr.mxu0 0.0
    %274 = vmatpush1.msra.mxu0 %v249
    %275 = vmatprep.subr.mxu0 0.0
    %276 = vmatpush1.msra.mxu0 %v248
    %277 = vmatprep.subr.mxu0 0.0
    %278 = vmatpush1.msra.mxu0 %v247
    %279 = vmatprep.subr.mxu0 0.0
    %280 = vmatpush1.msra.mxu0 %v246
    %281 = vmatprep.subr.mxu0 0.0
    %282 = vmatpush1.msra.mxu0 %v245
    %283 = vmatprep.subr.mxu0 0.0
    %284 = vmatpush1.msra.mxu0 %v244
    %285 = vmatprep.subr.mxu0 0.0
    %286 = vmatpush1.msra.mxu0 %v243
    %287 = vmatprep.subr.mxu0 0.0
    %288 = vmatpush1.msra.mxu0 %v242
    %289 = vmatprep.subr.mxu0 0.0
    %290 = vmatpush1.msra.mxu0 %v241
    %291 = vmatprep.subr.mxu0 0.0
    %292 = vmatpush1.msra.mxu0 %v240
    %293 = vmatprep.subr.mxu0 0.0
    %294 = vmatpush2.msra.mxu0 0.0
    %295 = vmatprep.subr.mxu0 0.0
    %296 = vmatpush2.msra.mxu0 0.0
    %297 = vmatprep.subr.mxu0 0.0
    %298 = vmatpush2.msra.mxu0 0.0
    %299 = vmatprep.subr.mxu0 0.0
    %300 = vmatpush2.msra.mxu0 0.0
    %301 = vmatprep.subr.mxu0 0.0
    %302 = vmatpush2.msra.mxu0 0.0
    %303 = vmatprep.subr.mxu0 0.0
    %304 = vmatpush2.msra.mxu0 0.0
    %305 = vmatprep.subr.mxu0 0.0
    %306 = vmatpush2.msra.mxu0 0.0
    %307 = vmatprep.subr.mxu0 0.0
    %308 = vmatpush2.msra.mxu0 0.0
    %309 = vmatprep.subr.mxu0 0.0
    %310 = vmatpush2.msra.mxu0 0.0
    %311 = vmatprep.subr.mxu0 0.0
    %312 = vmatpush2.msra.mxu0 0.0
    %313 = vmatprep.subr.mxu0 0.0
    %314 = vmatpush2.msra.mxu0 0.0
    %315 = vmatprep.subr.mxu0 0.0
    %316 = vmatpush2.msra.mxu0 0.0
    %317 = vmatprep.subr.mxu0 0.0
    %318 = vmatpush2.msra.mxu0 0.0
    %319 = vmatprep.subr.mxu0 0.0
    %320 = vmatpush2.msra.mxu0 0.0
    %321 = vmatprep.subr.mxu0 0.0
    %322 = vmatpush2.msra.mxu0 0.0
    %323 = vmatprep.subr.mxu0 0.0
    %324 = vmatpush2.msra.mxu0 0.0
    %325 = vmatprep.mubr.f32.mxu0 0.0
    %326 = vmatmul.mubr.f32.gmra.mxu0 %v256
    %v327 = vpop.f32.mrf.mxu0
    %v328 = vadd.f32 0.0, %v327
    %v329 = vpop.f32.mrf.mxu0
    %330 = vmatprep.mubr.f32.mxu0 0.0
    %331 = vmatmul.mubr.f32.gmra.mxu0 %v257
    %v332 = vpop.f32.mrf.mxu0
    %v333 = vadd.f32 0.0, %v332
    %v334 = vpop.f32.mrf.mxu0
    %335 = vmatprep.mubr.f32.mxu0 0.0
    %336 = vmatmul.mubr.f32.gmra.mxu0 %v258
    %v337 = vpop.f32.mrf.mxu0
    %v338 = vadd.f32 0.0, %v337
    %v339 = vpop.f32.mrf.mxu0
    %340 = vmatprep.mubr.f32.mxu0 0.0
    %341 = vmatmul.mubr.f32.gmra.mxu0 %v259
    %v342 = vpop.f32.mrf.mxu0
    %v343 = vadd.f32 0.0, %v342
    %v344 = vpop.f32.mrf.mxu0
    %345 = vmatprep.mubr.f32.mxu0 0.0
    %346 = vmatmul.mubr.f32.gmra.mxu0 %v260
    %v347 = vpop.f32.mrf.mxu0
    %v348 = vadd.f32 0.0, %v347
    %v349 = vpop.f32.mrf.mxu0
    %350 = vdwg.mxu0
    %vm351 = vcmp.lt.s32.totalorder %v44, 16
    %vm352 = vcmp.lt.s32.totalorder %v45, 16
    %vm353 = vcmp.lt.s32.totalorder %v46, 16
    %vm354 = vcmp.lt.s32.totalorder %v47, 16
    %vm355 = vcmp.lt.s32.totalorder %v48, 16
    %v356 = vmul.f32 %v328, %v328
    %v357 = vmul.f32 %v333, %v333
    %v358 = vmul.f32 %v338, %v338
    %v359 = vmul.f32 %v343, %v343
    %v360 = vmul.f32 %v348, %v348
    %v361 = vsel %vm351, 1, 0
    %v362 = vsel %vm352, 1, 0
    %v363 = vsel %vm353, 1, 0
    %v364 = vsel %vm354, 1, 0
    %v365 = vsel %vm355, 1, 0
    %vm366 = vcmp.eq.s32.totalorder %v361, 1
    %vm367 = vcmp.eq.s32.totalorder %v362, 1
    %vm368 = vcmp.eq.s32.totalorder %v363, 1
    %vm369 = vcmp.eq.s32.totalorder %v364, 1
    %vm370 = vcmp.eq.s32.totalorder %v365, 1
    %v371 = vsel %vm366, %v356, %v328
    %v372 = vsel %vm367, %v357, %v333
    %v373 = vsel %vm368, %v358, %v338
    %v374 = vsel %vm369, %v359, %v343
    %v375 = vsel %vm370, %v360, %v348
    %v376 = vadd.f32 %v371, %v372
    %v377 = vadd.f32 %v376, %v373
    %v378 = vadd.f32 %v377, %v374
    %v379 = vadd.f32 %v378, %v375
    %v380 = vrot.slane %v379, 4
    %v381 = vadd.f32 %v379, %v380
    %v382 = vrot.slane %v381, 2
    %v383 = vadd.f32 %v381, %v382
    %v384 = vrot.slane %v383, 1
    %v385 = vadd.f32 %v383, %v384
    %s386 = sld [smem:[#allocation2]]
    %v387 = vstv %s386
    %v388 = vadd.f32 %v385, %v387
    %389 = vst [vmem:[#allocation8] sm:$0x1] %v388
    // Predicated region
    $region22: #{tpu_custom_call.1} parent=1 // pred_check
      _
    $region23: #{tpu_custom_call.1} parent=1 // pred_check_branch
      %391 = sbr.rel (0) target = $region25
    $region24: #{tpu_custom_call.1} parent=1 // pred_region
      %s393 = ssub.s32 16, 16
      %394 = vsyncadd [#allocation5], %s393
      %s396 = sshll.u32 [#allocation8], 4
      %s397 = int_to_ptr.vmem [resolvable:$true] %s396
      %399 = dma.vmem_to_hbm [thread:$0]  %s397, 16, %s3, [#allocation5]
    $region25: #{tpu_custom_call.1} parent=1 // pred_fallthru
      _
    // Predicated region
    $region26: #{tpu_custom_call.1} parent=1 // pred_check
      _
    $region27: #{tpu_custom_call.1} parent=1 // pred_check_branch
      %401 = sbr.rel (0) target = $region29
    $region28: #{tpu_custom_call.1} parent=1 // pred_region
      %402 = dma.done [#allocation5], 16
    $region29: #{tpu_custom_call.1} parent=1 // pred_fallthru
      _
    %403 = vsyncpa [#allocation4], 1
    %404 = vsyncpa [#allocation7], 1
    %405 = vsyncpa [#allocation5], 1

</llo_original>
